<compile_context>
chip_gen: v7x
topology: tpu7x:2x2x1
jax: 0.10.0
libtpu: 0.0.40
codegen_flags: <defaults>
</compile_context>

<pallas_src>
import jax
import jax.numpy as jnp
from jax.experimental import pallas as pl
from jax.experimental.pallas import tpu as pltpu


def _round_up(x: int, m: int) -> int:
    return (x + m - 1) // m * m


def _linear_kernel(x_ref, w_ref, b_ref, o_ref):
    # One (tm x K) @ (K x tn) MXU matmul + bias add per grid step.
    acc = jnp.dot(x_ref[...], w_ref[...], preferred_element_type=jnp.float32)
    o_ref[...] = (acc + b_ref[...].astype(jnp.float32)).astype(o_ref.dtype)


def pallas_linear(x, w, b, *, tm: int = 256, tn: int = 256):
    """y = x @ w + b.  x: [M, K], w: [K, N], b: [1, N] -> y: [M, N]."""
    m, k = x.shape
    k_w, n = w.shape
    assert k == k_w, (k, k_w)
    assert b.shape == (1, n), b.shape

    # Sublane granularity: 8 rows for 4-byte dtypes, 16 for bf16, 32 for 8-bit.
    sub = max(8, 32 // jnp.dtype(x.dtype).itemsize)

    # Adapt tiles to small problems (never exceed padded full extent).
    tm = min(tm, _round_up(m, sub))
    tn = min(tn, _round_up(n, 128))
    m_pad = _round_up(m, tm)
    n_pad = _round_up(n, tn)

    x_p = x if m_pad == m else jnp.pad(x, ((0, m_pad - m), (0, 0)))
    w_p = w if n_pad == n else jnp.pad(w, ((0, 0), (0, n_pad - n)))
    b_p = b if n_pad == n else jnp.pad(b, ((0, 0), (0, n_pad - n)))

    grid = (m_pad // tm, n_pad // tn)
    itemsize = jnp.dtype(x.dtype).itemsize
    bytes_accessed = (m_pad * k + k * n_pad + n_pad + m_pad * n_pad) * itemsize

    out = pl.pallas_call(
        _linear_kernel,
        out_shape=jax.ShapeDtypeStruct((m_pad, n_pad), x.dtype),
        grid_spec=pltpu.PrefetchScalarGridSpec(
            num_scalar_prefetch=0,
            grid=grid,
            in_specs=[
                pl.BlockSpec((tm, k), lambda i, j: (i, 0)),   # x row-tile
                pl.BlockSpec((k, tn), lambda i, j: (0, j)),   # W column-slab
                pl.BlockSpec((1, tn), lambda i, j: (0, j)),   # bias slab
            ],
            out_specs=pl.BlockSpec((tm, tn), lambda i, j: (i, j)),
        ),
        compiler_params=pltpu.CompilerParams(
            dimension_semantics=("parallel", "parallel"),
            vmem_limit_bytes=64 * 1024 * 1024,
        ),
        cost_estimate=pl.CostEstimate(
            flops=2 * m_pad * n_pad * k,
            transcendentals=0,
            bytes_accessed=int(bytes_accessed),
        ),
    )(x_p, w_p, b_p)

    if m_pad != m or n_pad != n:
        out = out[:m, :n]
    return out


@jax.jit
def _qkv_self_attn(x, wq, wk, wv, bq, bk, bv):
    """k = v = q path: one fused wide matmul, then split the outputs."""
    w = jnp.concatenate([wq, wk, wv], axis=1)
    b = jnp.concatenate([bq, bk, bv], axis=1)
    y = pallas_linear(x, w, b)
    out_q = wq.shape[1]
    out_k = wk.shape[1]
    return (y[:, :out_q],
            y[:, out_q:out_q + out_k],
            y[:, out_q + out_k:])


@jax.jit
def _qkv_cross_attn(xq, xk, xv, wq, wk, wv, bq, bk, bv):
    """Distinct q/k/v inputs: three independent tiled linears."""
    return (pallas_linear(xq, wq, bq),
            pallas_linear(xk, wk, bk),
            pallas_linear(xv, wv, bv))


def init_unfused_qkv_params(key, emb_dim, nheads, kvheads,
                            emb_kq_per_head, emb_v_per_head, use_bias=True,
                            dtype=jnp.float32):
    """Mirrors UnfusedQKV.reset_parameters: trunc_normal(std=0.02) weights,
    zero biases.  Weights returned as [emb_dim, out_features]."""
    kq, kk, kv = jax.random.split(key, 3)
    std = 0.02

    def trunc(k, out_features):
        w = jax.random.truncated_normal(
            k, -2.0, 2.0, (out_features, emb_dim), dtype) * std
        return w.T  # -> [emb_dim, out_features]

    out_q = nheads * emb_kq_per_head
    out_k = kvheads * emb_kq_per_head
    out_v = kvheads * emb_v_per_head
    wq = trunc(kq, out_q)
    wk = trunc(kk, out_k)
    wv = trunc(kv, out_v)
    # use_bias=False is modeled with zero biases (same math as no bias).
    bq = jnp.zeros((1, out_q), dtype)
    bk = jnp.zeros((1, out_k), dtype)
    bv = jnp.zeros((1, out_v), dtype)
    return wq, wk, wv, bq, bk, bv


def unfused_qkv_forward(q, k, v, params):
    """Replicates UnfusedQKV.forward.  q/k/v: [batch, seq, emb_dim]
    (k, v may both be None -> self-attention, fused single matmul)."""
    wq, wk, wv, bq, bk, bv = params
    if k is None and v is None:
        b, s, e = q.shape
        xq = q.reshape(b * s, e)
        qo, ko, vo = _qkv_self_attn(xq, wq, wk, wv, bq, bk, bv)
        return (qo.reshape(b, s, -1), ko.reshape(b, s, -1),
                vo.reshape(b, s, -1))
    elif k is None or v is None:
        raise ValueError(
            "both k and v must either be given as tensors or both None")
    bq_, sq_, e = q.shape
    bk_, sk_, _ = k.shape
    bv_, sv_, _ = v.shape
    xq = q.reshape(bq_ * sq_, e)
    xk = k.reshape(bk_ * sk_, e)
    xv = v.reshape(bv_ * sv_, e)
    qo, ko, vo = _qkv_cross_attn(xq, xk, xv, wq, wk, wv, bq, bk, bv)
    return (qo.reshape(bq_, sq_, -1), ko.reshape(bk_, sk_, -1),
            vo.reshape(bv_, sv_, -1))


if __name__ == "__main__":
    # Small, module-consistent shapes.
    batch, seq = 2, 8
    emb_dim = 32
    nheads, kvheads = 4, 2
    emb_kq_per_head, emb_v_per_head = 8, 8

    key = jax.random.PRNGKey(0)
    k_params, k_q, k_k, k_v = jax.random.split(key, 4)

    params = init_unfused_qkv_params(
        k_params, emb_dim, nheads, kvheads, emb_kq_per_head, emb_v_per_head)

    q_in = jax.random.normal(k_q, (batch, seq, emb_dim), jnp.float32)
    k_in = jax.random.normal(k_k, (batch, seq, emb_dim), jnp.float32)
    v_in = jax.random.normal(k_v, (batch, seq, emb_dim), jnp.float32)

    # Cross-attention style call (explicit k, v) -> three tiled linears.
    queries, keys, values = unfused_qkv_forward(q_in, k_in, v_in, params)
    jax.block_until_ready((queries, keys, values))

    # Self-attention style call (k = v = None) -> single fused wide matmul.
    q2, k2, v2 = unfused_qkv_forward(q_in, None, None, params)
    jax.block_until_ready((q2, k2, v2))

    # Reference check against plain JAX (same math as F.linear).
    wq, wk, wv, bq, bk, bv = params
    ref_q = q_in.reshape(-1, emb_dim) @ wq + bq
    ref_k = k_in.reshape(-1, emb_dim) @ wk + bk
    ref_v = v_in.reshape(-1, emb_dim) @ wv + bv
    assert jnp.allclose(queries.reshape(-1, queries.shape[-1]), ref_q, atol=1e-5)
    assert jnp.allclose(keys.reshape(-1, keys.shape[-1]), ref_k, atol=1e-5)
    assert jnp.allclose(values.reshape(-1, values.shape[-1]), ref_v, atol=1e-5)

    ref_q2 = q_in.reshape(-1, emb_dim) @ wq + bq
    ref_k2 = q_in.reshape(-1, emb_dim) @ wk + bk
    ref_v2 = q_in.reshape(-1, emb_dim) @ wv + bv
    assert jnp.allclose(q2.reshape(-1, q2.shape[-1]), ref_q2, atol=1e-5)
    assert jnp.allclose(k2.reshape(-1, k2.shape[-1]), ref_k2, atol=1e-5)
    assert jnp.allclose(v2.reshape(-1, v2.shape[-1]), ref_v2, atol=1e-5)

    assert queries.shape == (batch, seq, nheads * emb_kq_per_head)
    assert keys.shape == (batch, seq, kvheads * emb_kq_per_head)
    assert values.shape == (batch, seq, kvheads * emb_v_per_head)

    print("KERNEL_OK")
</pallas_src>

<mosaic_0001>
module attributes {stable_mosaic.version = 11 : i64} {
  func.func @_linear_kernel(%arg0: i32, %arg1: i32, %arg2: memref<16x32xf32, #tpu.memory_space<vmem>>, %arg3: memref<32x128xf32, #tpu.memory_space<vmem>>, %arg4: memref<1x128xf32, #tpu.memory_space<vmem>>, %arg5: memref<16x128xf32, #tpu.memory_space<vmem>>) attributes {dimension_semantics = [#tpu.dimension_semantics<parallel>, #tpu.dimension_semantics<parallel>], iteration_bounds = array<i64: 1, 1>, scalar_prefetch = 0 : i64, scratch_operands = 0 : i64, tpu.core_type = #tpu.core_type<tc>, window_params = [{transform_indices = @transform_0, window_bounds = array<i64: 16, 32>}, {transform_indices = @transform_1, window_bounds = array<i64: 32, 128>}, {transform_indices = @transform_2, window_bounds = array<i64: 1, 128>}, {transform_indices = @transform_3, window_bounds = array<i64: 16, 128>}]} {
    %c0 = arith.constant 0 : index
    %c0_0 = arith.constant 0 : index
    %0 = vector.load %arg2[%c0, %c0_0] : memref<16x32xf32, #tpu.memory_space<vmem>>, vector<16x32xf32>
    %c0_1 = arith.constant 0 : index
    %c0_2 = arith.constant 0 : index
    %1 = vector.load %arg3[%c0_1, %c0_2] : memref<32x128xf32, #tpu.memory_space<vmem>>, vector<32x128xf32>
    %cst = arith.constant dense<0.000000e+00> : vector<16x128xf32>
    %2 = tpu.matmul %0, %1, %cst {dimension_numbers = #tpu.dot_dimension_numbers<[1], [0], [0], [1], [0, 0, 1, 1], [], []>} : vector<16x32xf32>, vector<32x128xf32>, vector<16x128xf32> -> vector<16x128xf32>
    %c0_3 = arith.constant 0 : index
    %c0_4 = arith.constant 0 : index
    %3 = vector.load %arg4[%c0_3, %c0_4] : memref<1x128xf32, #tpu.memory_space<vmem>>, vector<1x128xf32>
    %4 = vector.broadcast %3 : vector<1x128xf32> to vector<16x128xf32>
    %5 = arith.addf %2, %4 : vector<16x128xf32>
    %c0_5 = arith.constant 0 : index
    %c0_6 = arith.constant 0 : index
    %6 = vector.load %arg5[%c0_5, %c0_6] : memref<16x128xf32, #tpu.memory_space<vmem>>, vector<16x128xf32>
    tpu.vector_store %arg5[%c0_5, %c0_6], %5 {strides = array<i32>} : memref<16x128xf32, #tpu.memory_space<vmem>>, vector<16x128xf32>,
    return
  }
  func.func @transform_0(%arg0: i32, %arg1: i32) -> (i32, i32) {
    %c0_i32 = arith.constant 0 : i32
    %c0_i32_0 = arith.constant 0 : i32
    return %arg0, %c0_i32 : i32, i32
  }
  func.func @transform_1(%arg0: i32, %arg1: i32) -> (i32, i32) {
    %c0_i32 = arith.constant 0 : i32
    %c0_i32_0 = arith.constant 0 : i32
    return %c0_i32, %arg1 : i32, i32
  }
  func.func @transform_2(%arg0: i32, %arg1: i32) -> (i32, i32) {
    %c0_i32 = arith.constant 0 : i32
    %c0_i32_0 = arith.constant 0 : i32
    return %c0_i32, %arg1 : i32, i32
  }
  func.func @transform_3(%arg0: i32, %arg1: i32) -> (i32, i32) {
    %c0_i32 = arith.constant 0 : i32
    return %arg0, %arg1 : i32, i32
  }
}

</mosaic_0001>

<llo_original>
// kernel: _qkv_cross_attn.4
$region0: #{_qkv_cross_attn.4}
  #allocation0 [shape = 'u32[]', space=smem, size = 0x4, offset = 0x4, fixed_abs, tag = 'smem constant byte address 0x4 - core index']
  #allocation1 [shape = 'u32[144,128]{1,0:T(1,128)}', space=vmem, size = 0x12000, scoped, tag = 'internal scratch']
  %s0 = inlined_call_operand.hbm [shape: f32[16,32], index: 0, kind: input, shape index: {}]
  %s1 = inlined_call_operand.hbm [shape: f32[32,128], index: 1, kind: input, shape index: {}]
  %s2 = inlined_call_operand.hbm [shape: f32[1,128], index: 2, kind: input, shape index: {}]
  %s3 = inlined_call_operand.hbm [shape: f32[16,128], index: 3, kind: output, shape index: {}]
  %s4 = sld [smem:[#allocation0]]
  $region34: #{_qkv_cross_attn.4} parent=0
    _
  %s6 = ssub.s32 1, %s4
  %s7 = scalar_select 0, %s6, %s4
  $region1: #{_qkv_cross_attn.4} parent=0
    #allocation2 [shape = 'u8[8192]{0}', space=vmem, size = 0x2000, scoped, tag = 'input window, operand 0, single buffered']
    #allocation3 [shape = 's32[1]{0}', space=sflag, size = 0x4, scoped, tag = 'scoped memory for _qkv_cross_attn.4']
    #allocation4 [shape = 's32[1]{0}', space=sflag, size = 0x4, scoped, tag = 'scoped memory for _qkv_cross_attn.4']
    #allocation5 [shape = 'u8[16384]{0}', space=vmem, size = 0x4000, scoped, tag = 'input window, operand 1, single buffered']
    #allocation6 [shape = 's32[1]{0}', space=sflag, size = 0x4, scoped, tag = 'scoped memory for _qkv_cross_attn.4']
    #allocation7 [shape = 'u8[512]{0}', space=vmem, size = 0x400, scoped, tag = 'input window, operand 2, single buffered']
    #allocation8 [shape = 'u8[8192]{0}', space=vmem, size = 0x2000, scoped, tag = 'output window, operand 0, single buffered']
    %8 = vsyncpa [#allocation3], 0
    %9 = vsyncpa [#allocation6], 0
    %10 = vsyncpa [#allocation4], 0
    // Predicated region
    $region2: #{_qkv_cross_attn.4} parent=1 // pred_check
      _
    $region3: #{_qkv_cross_attn.4} parent=1 // pred_check_branch
      %12 = sbr.rel (0) target = $region5
    $region4: #{_qkv_cross_attn.4} parent=1 // pred_region
      %s14 = ssub.s32 256, 256
      %15 = vsyncadd [#allocation3], %s14
      %s16 = sshll.u32 [#allocation2], 4
      %s17 = int_to_ptr.vmem [resolvable:$true] %s16
      %22 = dma.hbm_to_vmem [thread:$0]  %s0, 256, %s17, [#allocation3], 128, 128, 8
    $region5: #{_qkv_cross_attn.4} parent=1 // pred_fallthru
      _
    // Predicated region
    $region6: #{_qkv_cross_attn.4} parent=1 // pred_check
      _
    $region7: #{_qkv_cross_attn.4} parent=1 // pred_check_branch
      %24 = sbr.rel (0) target = $region9
    $region8: #{_qkv_cross_attn.4} parent=1 // pred_region
      %s26 = ssub.s32 512, 512
      %27 = vsyncadd [#allocation6], %s26
      %s28 = sshll.u32 [#allocation5], 4
      %s29 = int_to_ptr.vmem [resolvable:$true] %s28
      %34 = dma.hbm_to_vmem [thread:$0]  %s1, 512, %s29, [#allocation6], 128, 128, 8
    $region9: #{_qkv_cross_attn.4} parent=1 // pred_fallthru
      _
    // Predicated region
    $region10: #{_qkv_cross_attn.4} parent=1 // pred_check
      _
    $region11: #{_qkv_cross_attn.4} parent=1 // pred_check_branch
      %36 = sbr.rel (0) target = $region13
    $region12: #{_qkv_cross_attn.4} parent=1 // pred_region
      %s38 = ssub.s32 16, 16
      %39 = vsyncadd [#allocation6], %s38
      %s41 = sshll.u32 [#allocation7], 4
      %s42 = int_to_ptr.vmem [resolvable:$true] %s41
      %44 = dma.hbm_to_vmem [thread:$0]  %s2, 16, %s42, [#allocation6]
    $region13: #{_qkv_cross_attn.4} parent=1 // pred_fallthru
      _
    // Predicated region
    $region14: #{_qkv_cross_attn.4} parent=1 // pred_check
      _
    $region15: #{_qkv_cross_attn.4} parent=1 // pred_check_branch
      %46 = sbr.rel (0) target = $region17
    $region16: #{_qkv_cross_attn.4} parent=1 // pred_region
      %47 = dma.done [#allocation3], 256
    $region17: #{_qkv_cross_attn.4} parent=1 // pred_fallthru
      _
    // Predicated region
    $region18: #{_qkv_cross_attn.4} parent=1 // pred_check
      _
    $region19: #{_qkv_cross_attn.4} parent=1 // pred_check_branch
      %49 = sbr.rel (0) target = $region21
    $region20: #{_qkv_cross_attn.4} parent=1 // pred_region
      %50 = dma.done [#allocation6], 512
    $region21: #{_qkv_cross_attn.4} parent=1 // pred_fallthru
      _
    // Predicated region
    $region22: #{_qkv_cross_attn.4} parent=1 // pred_check
      _
    $region23: #{_qkv_cross_attn.4} parent=1 // pred_check_branch
      %52 = sbr.rel (0) target = $region25
    $region24: #{_qkv_cross_attn.4} parent=1 // pred_region
      %53 = dma.done [#allocation6], 16
    $region25: #{_qkv_cross_attn.4} parent=1 // pred_fallthru
      _
    %v54 = vld [vmem:[#allocation2] sm:$0xff]
    %v55 = vld [vmem:[#allocation2 + $0x8] sm:$0xff]
    %v56 = vld [vmem:[#allocation5] sm:$0xff]
    %v57 = vld [vmem:[#allocation5 + $0x8] sm:$0xff]
    %v58 = vld [vmem:[#allocation5 + $0x10] sm:$0xff]
    %v59 = vld [vmem:[#allocation5 + $0x18] sm:$0xff]
    %v60 = vld [vmem:[#allocation7] sm:$0x1]
    %v62 = vlaneseq
    %v63 = vshrl.u32 %v62, 7
    %v64 = vsub.s32 0, %v63
    %v65 = vrot.slane %v60, %v64
    %vm67 = vcmask 261120
    %v69 = vsel %vm67, %v54, 0
    %v72 = vsel %vm67, %v55, 0
    %74 = vmatprep.subr.mxu0 0.0
    %75 = vmatpush1.msra.mxu0 %v56
    %76 = vmatprep.subr.mxu0 0.0
    %77 = vmatpush1.msra.mxu0 %v57
    %78 = vmatprep.subr.mxu0 0.0
    %79 = vmatpush1.msra.mxu0 %v58
    %80 = vmatprep.subr.mxu0 0.0
    %81 = vmatpush1.msra.mxu0 %v59
    %82 = vmatprep.subr.mxu0 0.0
    %83 = vmatpush1.msra.mxu0 0.0
    %84 = vmatprep.subr.mxu0 0.0
    %85 = vmatpush1.msra.mxu0 0.0
    %86 = vmatprep.subr.mxu0 0.0
    %87 = vmatpush1.msra.mxu0 0.0
    %88 = vmatprep.subr.mxu0 0.0
    %89 = vmatpush1.msra.mxu0 0.0
    %90 = vmatprep.subr.mxu0 0.0
    %91 = vmatpush1.msra.mxu0 0.0
    %92 = vmatprep.subr.mxu0 0.0
    %93 = vmatpush1.msra.mxu0 0.0
    %94 = vmatprep.subr.mxu0 0.0
    %95 = vmatpush1.msra.mxu0 0.0
    %96 = vmatprep.subr.mxu0 0.0
    %97 = vmatpush1.msra.mxu0 0.0
    %98 = vmatprep.subr.mxu0 0.0
    %99 = vmatpush1.msra.mxu0 0.0
    %100 = vmatprep.subr.mxu0 0.0
    %101 = vmatpush1.msra.mxu0 0.0
    %102 = vmatprep.subr.mxu0 0.0
    %103 = vmatpush1.msra.mxu0 0.0
    %104 = vmatprep.subr.mxu0 0.0
    %105 = vmatpush1.msra.mxu0 0.0
    %106 = vmatprep.subr.mxu0 0.0
    %107 = vmatpush1.msra.mxu0 0.0
    %108 = vmatprep.subr.mxu0 0.0
    %109 = vmatpush1.msra.mxu0 0.0
    %110 = vmatprep.subr.mxu0 0.0
    %111 = vmatpush1.msra.mxu0 0.0
    %112 = vmatprep.subr.mxu0 0.0
    %113 = vmatpush1.msra.mxu0 0.0
    %114 = vmatprep.subr.mxu0 0.0
    %115 = vmatpush1.msra.mxu0 0.0
    %116 = vmatprep.subr.mxu0 0.0
    %117 = vmatpush1.msra.mxu0 0.0
    %118 = vmatprep.subr.mxu0 0.0
    %119 = vmatpush1.msra.mxu0 0.0
    %120 = vmatprep.subr.mxu0 0.0
    %121 = vmatpush1.msra.mxu0 0.0
    %122 = vmatprep.subr.mxu0 0.0
    %123 = vmatpush1.msra.mxu0 0.0
    %124 = vmatprep.subr.mxu0 0.0
    %125 = vmatpush1.msra.mxu0 0.0
    %126 = vmatprep.subr.mxu0 0.0
    %127 = vmatpush1.msra.mxu0 0.0
    %128 = vmatprep.subr.mxu0 0.0
    %129 = vmatpush1.msra.mxu0 0.0
    %130 = vmatprep.subr.mxu0 0.0
    %131 = vmatpush1.msra.mxu0 0.0
    %132 = vmatprep.subr.mxu0 0.0
    %133 = vmatpush1.msra.mxu0 0.0
    %134 = vmatprep.subr.mxu0 0.0
    %135 = vmatpush1.msra.mxu0 0.0
    %136 = vmatprep.subr.mxu0 0.0
    %137 = vmatpush1.msra.mxu0 0.0
    %138 = vmatprep.mubr.f32.mxu0 0.0
    %139 = vmatmul.mubr.f32.gmra.mrb[0].mxu0 %v69
    %v140 = vpop.f32.mrb[0].mxu0
    %v141 = vadd.f32 %v65, %v140
    %v142 = vpop.f32.mrb[0].mxu0
    %143 = vmatprep.mubr.f32.mxu0 0.0
    %144 = vmatmul.mubr.f32.gmra.mrb[0].mxu0 %v72
    %v145 = vpop.f32.mrb[0].mxu0
    %v146 = vadd.f32 %v65, %v145
    %v147 = vpop.f32.mrb[0].mxu0
    %148 = vdwg.mxu0
    %149 = vst [vmem:[#allocation8] sm:$0xff] %v141
    %150 = vst [vmem:[#allocation8 + $0x8] sm:$0xff] %v146
    // Predicated region
    $region26: #{_qkv_cross_attn.4} parent=1 // pred_check
      _
    $region27: #{_qkv_cross_attn.4} parent=1 // pred_check_branch
      %152 = sbr.rel (0) target = $region29
    $region28: #{_qkv_cross_attn.4} parent=1 // pred_region
      %s154 = ssub.s32 256, 256
      %155 = vsyncadd [#allocation4], %s154
      %s156 = sshll.u32 [#allocation8], 4
      %s157 = int_to_ptr.vmem [resolvable:$true] %s156
      %162 = dma.vmem_to_hbm [thread:$0]  %s157, 256, %s3, [#allocation4], 128, 128, 8
    $region29: #{_qkv_cross_attn.4} parent=1 // pred_fallthru
      _
    // Predicated region
    $region30: #{_qkv_cross_attn.4} parent=1 // pred_check
      _
    $region31: #{_qkv_cross_attn.4} parent=1 // pred_check_branch
      %164 = sbr.rel (0) target = $region33
    $region32: #{_qkv_cross_attn.4} parent=1 // pred_region
      %165 = dma.done [#allocation4], 256
    $region33: #{_qkv_cross_attn.4} parent=1 // pred_fallthru
      _
    %166 = vsyncpa [#allocation3], 1
    %167 = vsyncpa [#allocation6], 1
    %168 = vsyncpa [#allocation4], 1

</llo_original>
